<compile_context>
chip_gen: v7x
topology: tpu7x:2x2x1
jax: 0.10.0
libtpu: 0.0.40
codegen_flags: <defaults>
</compile_context>

<pallas_src>
import jax
import jax.numpy as jnp
from jax.experimental import pallas as pl
from jax.experimental.pallas import tpu as pltpu

QUANT_MIN = -128.0  # qint8
QUANT_MAX = 127.0

_LANES = 128
_BLOCK_ROWS = 2048  # rows per grid step -> 1 MiB per f32 block (mem-bound sweet spot)


def _fake_quant_kernel(scale_ref, zp_ref, x_ref, o_ref):
    # scale_ref / zp_ref: (1, 1) f32 scalars in SMEM
    scale = scale_ref[0, 0]
    zp = zp_ref[0, 0]
    # Fold the zero_point add/sub into the clamp bounds:
    #   (clip(round(x/s) + zp, qmin, qmax) - zp) * s == clip(round(x/s), qmin-zp, qmax-zp) * s
    lo = QUANT_MIN - zp
    hi = QUANT_MAX - zp
    # Quantize in f32 regardless of the storage dtype (matches torch semantics:
    # fake-quant computed in fp32, then cast). Divide by scale (not mul by 1/scale)
    # for bit-exact parity at .5 rounding boundaries; free at HBM-bound.
    x = x_ref[...].astype(jnp.float32)
    q = jnp.clip(jnp.round(x / scale), lo, hi)
    o_ref[...] = (q * scale).astype(o_ref.dtype)


def _sublane_group_rows(dtype):
    # rows per packed vreg sublane-group: f32 -> 8, bf16 -> 16, int8/fp8 -> 32
    itemsize = jnp.dtype(dtype).itemsize
    packing = max(1, 4 // max(itemsize, 1))
    return 8 * packing


def quant_stub_forward(x, scale, zero_point):
    """Fake-quantize `x` (any shape, f32/bf16) with fixed per-tensor qparams."""
    orig_shape = x.shape
    dtype = x.dtype
    xf = x.reshape(-1)
    n = xf.shape[0]

    # Pad only when needed, and only up to one vreg tile (8x128 f32 / 16x128 bf16).
    # Common NCHW shapes (C*H*W multiple of 128) skip the pad/slice copies entirely.
    tile_elems = _sublane_group_rows(dtype) * _LANES
    n_pad = ((n + tile_elems - 1) // tile_elems) * tile_elems
    padded = n_pad != n
    if padded:
        xf = jnp.pad(xf, (0, n_pad - n))

    x2d = xf.reshape(-1, _LANES)  # (rows, 128), rows multiple of the sublane group
    rows = x2d.shape[0]

    # Block rows: big (1 MiB f32) for large inputs, else the full (small) array.
    block_rows = min(_BLOCK_ROWS, rows)
    grid = (pl.cdiv(rows, block_rows),)  # ragged last block handled by Pallas masking

    scale_arr = jnp.asarray(scale, jnp.float32).reshape(1, 1)
    zp_arr = jnp.asarray(zero_point, jnp.float32).reshape(1, 1)

    out2d = pl.pallas_call(
        _fake_quant_kernel,
        out_shape=jax.ShapeDtypeStruct((rows, _LANES), dtype),
        grid_spec=pl.GridSpec(
            grid=grid,
            in_specs=[
                pl.BlockSpec(memory_space=pltpu.SMEM),  # scale (1,1)
                pl.BlockSpec(memory_space=pltpu.SMEM),  # zero_point (1,1)
                pl.BlockSpec((block_rows, _LANES), lambda i: (i, 0)),
            ],
            out_specs=pl.BlockSpec((block_rows, _LANES), lambda i: (i, 0)),
        ),
        compiler_params=pltpu.CompilerParams(
            dimension_semantics=("parallel",),  # lets v7x shard the grid over its 2 TCs
        ),
    )(scale_arr, zp_arr, x2d)

    if padded:
        out = out2d.reshape(-1)[:n].reshape(orig_shape)
    else:
        out = out2d.reshape(orig_shape)
    return out


def _reference(x, scale, zero_point):
    xf = x.astype(jnp.float32)
    q = jnp.clip(jnp.round(xf / scale) + zero_point, QUANT_MIN, QUANT_MAX)
    return ((q - zero_point) * scale).astype(x.dtype)


if __name__ == "__main__":
    key = jax.random.PRNGKey(0)

    # PyTorch-style NCHW input: batch=2, channels=4, spatial=16x16 (f32, lane-aligned).
    x = jax.random.normal(key, (2, 4, 16, 16), dtype=jnp.float32) * 2.0
    scale = 1.0 / 128.0  # fixed-scale init path: symmetric qint8
    zero_point = 0.0

    out = jax.block_until_ready(quant_stub_forward(x, scale, zero_point))
    ref = _reference(x, scale, zero_point)
    assert out.shape == x.shape and out.dtype == x.dtype
    assert jnp.allclose(out, ref, atol=1e-6), "mismatch vs reference (f32)"

    # Secondary check: bf16 input, non-lane-aligned shape, non-zero zero_point
    # (exercises the native-dtype streaming and minimal-pad paths).
    x2 = (jax.random.normal(jax.random.PRNGKey(1), (2, 3, 5, 7)) * 3.0).astype(jnp.bfloat16)
    out2 = jax.block_until_ready(quant_stub_forward(x2, 0.05, 3.0))
    ref2 = _reference(x2, 0.05, 3.0)
    assert out2.shape == x2.shape and out2.dtype == x2.dtype
    assert jnp.allclose(out2.astype(jnp.float32), ref2.astype(jnp.float32), atol=1e-3), \
        "mismatch vs reference (bf16)"

    # TODO(synk): observer/QTensor branches of QuantStub.forward (scale learning,
    # dtype reset, qparam bookkeeping) are host-side control flow with no kernel compute.

    print("KERNEL_OK")
</pallas_src>

<mosaic_0001>
module attributes {stable_mosaic.version = 11 : i64} {
  func.func @_fake_quant_kernel(%arg0: i32, %arg1: memref<1x1xf32, #tpu.memory_space<smem>>, %arg2: memref<1x1xf32, #tpu.memory_space<smem>>, %arg3: memref<16x128xf32, #tpu.memory_space<vmem>>, %arg4: memref<16x128xf32, #tpu.memory_space<vmem>>) attributes {dimension_semantics = [#tpu.dimension_semantics<parallel>], iteration_bounds = array<i64: 1>, scalar_prefetch = 0 : i64, scratch_operands = 0 : i64, tpu.core_type = #tpu.core_type<tc>, window_params = [{transform_indices = @transform_0, window_bounds = array<i64: 1, 1>}, {transform_indices = @transform_1, window_bounds = array<i64: 1, 1>}, {transform_indices = @transform_2, window_bounds = array<i64: 16, 128>}, {transform_indices = @transform_3, window_bounds = array<i64: 16, 128>}]} {
    %c0 = arith.constant 0 : index
    %c0_0 = arith.constant 0 : index
    %0 = memref.load %arg1[%c0, %c0_0] : memref<1x1xf32, #tpu.memory_space<smem>>
    %c0_1 = arith.constant 0 : index
    %c0_2 = arith.constant 0 : index
    %1 = memref.load %arg2[%c0_1, %c0_2] : memref<1x1xf32, #tpu.memory_space<smem>>
    %cst = arith.constant -1.280000e+02 : f32
    %2 = arith.subf %cst, %1 : f32
    %cst_3 = arith.constant 1.270000e+02 : f32
    %3 = arith.subf %cst_3, %1 : f32
    %c0_4 = arith.constant 0 : index
    %c0_5 = arith.constant 0 : index
    %4 = vector.load %arg3[%c0_4, %c0_5] : memref<16x128xf32, #tpu.memory_space<vmem>>, vector<16x128xf32>
    %5 = vector.broadcast %0 : f32 to vector<16x128xf32>
    %6 = arith.divf %4, %5 : vector<16x128xf32>
    %7 = math.roundeven %6 : vector<16x128xf32>
    %8 = vector.broadcast %2 : f32 to vector<16x128xf32>
    %9 = arith.maximumf %8, %7 : vector<16x128xf32>
    %10 = vector.broadcast %3 : f32 to vector<16x128xf32>
    %11 = arith.minimumf %10, %9 : vector<16x128xf32>
    %12 = vector.broadcast %0 : f32 to vector<16x128xf32>
    %13 = arith.mulf %11, %12 : vector<16x128xf32>
    %c0_6 = arith.constant 0 : index
    %c0_7 = arith.constant 0 : index
    %14 = vector.load %arg4[%c0_6, %c0_7] : memref<16x128xf32, #tpu.memory_space<vmem>>, vector<16x128xf32>
    tpu.vector_store %arg4[%c0_6, %c0_7], %13 {strides = array<i32>} : memref<16x128xf32, #tpu.memory_space<vmem>>, vector<16x128xf32>,
    return
  }
  func.func @transform_0(%arg0: i32) -> (i32, i32) {
    %c0_i32 = arith.constant 0 : i32
    %c0_i32_0 = arith.constant 0 : i32
    %c0_i32_1 = arith.constant 0 : i32
    return %c0_i32, %c0_i32_0 : i32, i32
  }
  func.func @transform_1(%arg0: i32) -> (i32, i32) {
    %c0_i32 = arith.constant 0 : i32
    %c0_i32_0 = arith.constant 0 : i32
    %c0_i32_1 = arith.constant 0 : i32
    return %c0_i32, %c0_i32_0 : i32, i32
  }
  func.func @transform_2(%arg0: i32) -> (i32, i32) {
    %c0_i32 = arith.constant 0 : i32
    %c0_i32_0 = arith.constant 0 : i32
    return %arg0, %c0_i32 : i32, i32
  }
  func.func @transform_3(%arg0: i32) -> (i32, i32) {
    %c0_i32 = arith.constant 0 : i32
    %c0_i32_0 = arith.constant 0 : i32
    return %arg0, %c0_i32 : i32, i32
  }
}

</mosaic_0001>

<llo_original>
// kernel: tpu_custom_call.1
$region0: #{tpu_custom_call.1}
  #allocation0 [shape = 'u32[]', space=smem, size = 0x4, offset = 0x4, fixed_abs, tag = 'smem constant byte address 0x4 - core index']
  #allocation1 [shape = 'u32[144,128]{1,0:T(1,128)}', space=vmem, size = 0x12000, scoped, tag = 'internal scratch']
  #allocation2 [shape = 'f32[1,1]{1,0:T(1,128)S(6)}', space=smem, size = 0x200, scoped, tag = 'scoped memory for tpu_custom_call.1']
  #allocation3 [shape = 'f32[1,1]{1,0:T(1,128)S(6)}', space=smem, size = 0x200, scoped, tag = 'scoped memory for tpu_custom_call.1']
  %s0 = inlined_call_operand.<no memory space> [shape: f32[1,1], index: 0, kind: input, shape index: {}]
  %s1 = inlined_call_operand.<no memory space> [shape: f32[1,1], index: 1, kind: input, shape index: {}]
  %s2 = inlined_call_operand.hbm [shape: f32[16,128], index: 2, kind: input, shape index: {}]
  %s3 = inlined_call_operand.hbm [shape: f32[16,128], index: 3, kind: output, shape index: {}]
  %s4 = sld [smem:[#allocation0]]
  $region26: #{tpu_custom_call.1} parent=0
    _
  %s6 = ssub.s32 1, %s4
  %s7 = scalar_select 0, %s6, %s4
  %8 = sst [smem:[#allocation2]] %s0
  %9 = sst [smem:[#allocation3]] %s1
  $region1: #{tpu_custom_call.1} parent=0
    #allocation4 [shape = 'u8[8192]{0}', space=vmem, size = 0x2000, scoped, tag = 'input window, operand 2, single buffered']
    #allocation5 [shape = 's32[1]{0}', space=sflag, size = 0x4, scoped, tag = 'scoped memory for tpu_custom_call.1']
    #allocation6 [shape = 's32[1]{0}', space=sflag, size = 0x4, scoped, tag = 'scoped memory for tpu_custom_call.1']
    #allocation7 [shape = 'u8[8192]{0}', space=vmem, size = 0x2000, scoped, tag = 'output window, operand 0, single buffered']
    %10 = vsyncpa [#allocation5], 0
    %11 = vsyncpa [#allocation6], 0
    // Predicated region
    $region2: #{tpu_custom_call.1} parent=1 // pred_check
      _
    $region3: #{tpu_custom_call.1} parent=1 // pred_check_branch
      %13 = sbr.rel (0) target = $region5
    $region4: #{tpu_custom_call.1} parent=1 // pred_region
      _
    $region5: #{tpu_custom_call.1} parent=1 // pred_fallthru
      _
    // Predicated region
    $region6: #{tpu_custom_call.1} parent=1 // pred_check
      _
    $region7: #{tpu_custom_call.1} parent=1 // pred_check_branch
      %15 = sbr.rel (0) target = $region9
    $region8: #{tpu_custom_call.1} parent=1 // pred_region
      _
    $region9: #{tpu_custom_call.1} parent=1 // pred_fallthru
      _
    // Predicated region
    $region10: #{tpu_custom_call.1} parent=1 // pred_check
      _
    $region11: #{tpu_custom_call.1} parent=1 // pred_check_branch
      %17 = sbr.rel (0) target = $region13
    $region12: #{tpu_custom_call.1} parent=1 // pred_region
      %s19 = ssub.s32 256, 256
      %20 = vsyncadd [#allocation5], %s19
      %s21 = sshll.u32 [#allocation4], 4
      %s22 = int_to_ptr.vmem [resolvable:$true] %s21
      %27 = dma.hbm_to_vmem [thread:$0]  %s2, 256, %s22, [#allocation5], 128, 128, 8
    $region13: #{tpu_custom_call.1} parent=1 // pred_fallthru
      _
    // Predicated region
    $region14: #{tpu_custom_call.1} parent=1 // pred_check
      _
    $region15: #{tpu_custom_call.1} parent=1 // pred_check_branch
      %29 = sbr.rel (0) target = $region17
    $region16: #{tpu_custom_call.1} parent=1 // pred_region
      %30 = dma.done [#allocation5], 256
    $region17: #{tpu_custom_call.1} parent=1 // pred_fallthru
      _
    %s31 = sld [smem:[#allocation2]]
    %s32 = sld [smem:[#allocation3]]
    %s33 = ssub.f32 -128.0, %s32
    %s34 = ssub.f32 127.0, %s32
    %v35 = vld [vmem:[#allocation4] sm:$0xff]
    %v36 = vld [vmem:[#allocation4 + $0x8] sm:$0xff]
    %v37 = vstv %s31
    %v38 = vrcp.pop %v37
    %v39 = vmul.f32 %v35, %v38
    %v40 = vmul.f32 %v36, %v38
    %v41 = vround.ne.pseudo %v39
    %v42 = vround.ne.pseudo %v40
    %v43 = vstv %s33
    %v44 = vmax.f32 %v43, %v41
    %v45 = vmax.f32 %v43, %v42
    %v46 = vstv %s34
    %v47 = vmin.f32 %v46, %v44
    %v48 = vmin.f32 %v46, %v45
    %v49 = vmul.f32 %v47, %v37
    %v50 = vmul.f32 %v48, %v37
    %51 = vst [vmem:[#allocation7] sm:$0xff] %v49
    %52 = vst [vmem:[#allocation7 + $0x8] sm:$0xff] %v50
    // Predicated region
    $region18: #{tpu_custom_call.1} parent=1 // pred_check
      _
    $region19: #{tpu_custom_call.1} parent=1 // pred_check_branch
      %54 = sbr.rel (0) target = $region21
    $region20: #{tpu_custom_call.1} parent=1 // pred_region
      %s56 = ssub.s32 256, 256
      %57 = vsyncadd [#allocation6], %s56
      %s58 = sshll.u32 [#allocation7], 4
      %s59 = int_to_ptr.vmem [resolvable:$true] %s58
      %64 = dma.vmem_to_hbm [thread:$0]  %s59, 256, %s3, [#allocation6], 128, 128, 8
    $region21: #{tpu_custom_call.1} parent=1 // pred_fallthru
      _
    // Predicated region
    $region22: #{tpu_custom_call.1} parent=1 // pred_check
      _
    $region23: #{tpu_custom_call.1} parent=1 // pred_check_branch
      %66 = sbr.rel (0) target = $region25
    $region24: #{tpu_custom_call.1} parent=1 // pred_region
      %67 = dma.done [#allocation6], 256
    $region25: #{tpu_custom_call.1} parent=1 // pred_fallthru
      _
    %68 = vsyncpa [#allocation5], 1
    %69 = vsyncpa [#allocation6], 1

</llo_original>
